<compile_context>
chip_gen: v7x
topology: tpu7x:2x2x1
jax: 0.10.0
libtpu: 0.0.40
codegen_flags: <defaults>
</compile_context>

<pallas_src>
import functools

import jax
import jax.numpy as jnp
from jax import lax
from jax.experimental import pallas as pl
from jax.experimental.pallas import tpu as pltpu


LAYER_DIMS = [64, 64, 32, 16, 8, 1]   # output dims of l1..l6 (PyTorch module)
PAD = 128                             # lane padding for all hidden/output dims


def _round_up(x, m):
    return (x + m - 1) // m * m


# ---------------------------------------------------------------------------
# Kernel: fused 5-matmul MLP (l1+l2 fused on host), bf16 MXU, f32 accumulation.
# Arguments: x_ref, (W,b) x 5 layers, o_ref.
# ---------------------------------------------------------------------------
def _mlp_kernel(x_ref,
                wA, bA, wB, bB, wC, bC, wD, bD, wE, bE,
                o_ref, *, row_chunk):
    f32 = jnp.float32
    bf16 = jnp.bfloat16
    tile_m = x_ref.shape[0]
    num_chunks = tile_m // row_chunk

    # Tiny bf16 weights / f32 biases: load once per grid step.
    WA = wA[...]; WB = wB[...]; WC = wC[...]; WD = wD[...]; WE = wE[...]
    BA = bA[...]; BB = bB[...]; BC = bC[...]; BD = bD[...]; BE = bE[...]

    def dense_relu(h, W, b):
        z = jnp.dot(h, W, preferred_element_type=f32) + b
        return jnp.maximum(z, 0.0).astype(bf16)

    def chunk_body(c, carry):
        r0 = pl.multiple_of(c * row_chunk, row_chunk)
        h = x_ref[pl.ds(r0, row_chunk), :].astype(bf16)
        h = dense_relu(h, WA, BA)                              # relu(l2(l1(x)))  (fused)
        h = dense_relu(h, WB, BB)                              # relu(l3)
        h = dense_relu(h, WC, BC)                              # relu(l4)
        h = dense_relu(h, WD, BD)                              # relu(l5)
        y = jnp.dot(h, WE, preferred_element_type=f32) + BE    # l6, no activation
        o_ref[pl.ds(r0, row_chunk), :] = y
        return carry

    if num_chunks == 1:
        chunk_body(0, 0)
    else:
        lax.fori_loop(0, num_chunks, chunk_body, 0, unroll=True)


# ---------------------------------------------------------------------------
# Host-side parameter preparation: fuse l1+l2, zero-pad lanes to 128, cast to bf16.
# Done ONCE, outside the kernel.
# ---------------------------------------------------------------------------
def prepare_params(params, compute_dtype=jnp.bfloat16):
    """params: list of 6 (W:(in,out) f32, b:(1,out) f32) matching l1..l6."""
    (w1, b1), (w2, b2), (w3, b3), (w4, b4), (w5, b5), (w6, b6) = params
    # l1 has no activation -> fold it into l2 algebraically (exact in f32 algebra).
    w12 = w1 @ w2                      # (input_dim, 64)
    b12 = b1 @ w2 + b2                 # (1, 64)
    fused = [(w12, b12), (w3, b3), (w4, b4), (w5, b5), (w6, b6)]

    prepared = []
    for idx, (w, b) in enumerate(fused):
        k, n = w.shape
        k_pad = k if idx == 0 else PAD  # later layers consume 128-padded activations
        wp = jnp.zeros((k_pad, PAD), jnp.float32).at[:k, :n].set(w)
        bp = jnp.zeros((1, PAD), jnp.float32).at[:, :n].set(b)
        prepared.append((wp.astype(compute_dtype), bp))  # weights bf16, biases f32
    return prepared


# ---------------------------------------------------------------------------
# Wrapper
# ---------------------------------------------------------------------------
def dnn_classifier_forward(x, kparams, *, tile_m=None, row_chunk=256):
    """x: (B, input_dim) f32; kparams: output of prepare_params. Returns (B, 1) f32."""
    B, in_dim = x.shape

    if tile_m is None:
        tile_m = min(2048, _round_up(max(B, 8), 8))
    tile_m = _round_up(tile_m, 8)
    row_chunk = min(row_chunk, tile_m)
    if tile_m % row_chunk:
        row_chunk = tile_m                      # fall back to a single chunk

    b_pad = _round_up(B, tile_m)
    if b_pad != B:
        x = jnp.pad(x, ((0, b_pad - B), (0, 0)))

    flat_params = []
    param_specs = []
    for (w, b) in kparams:
        param_specs.append(pl.BlockSpec(w.shape, lambda i: (0, 0)))
        param_specs.append(pl.BlockSpec(b.shape, lambda i: (0, 0)))
        flat_params.extend([w, b])

    grid = (b_pad // tile_m,)
    out = pl.pallas_call(
        functools.partial(_mlp_kernel, row_chunk=row_chunk),
        out_shape=jax.ShapeDtypeStruct((b_pad, PAD), jnp.float32),
        grid_spec=pltpu.PrefetchScalarGridSpec(
            num_scalar_prefetch=0,
            grid=grid,
            in_specs=[pl.BlockSpec((tile_m, in_dim), lambda i: (i, 0))] + param_specs,
            out_specs=pl.BlockSpec((tile_m, PAD), lambda i: (i, 0)),
        ),
        compiler_params=pltpu.CompilerParams(
            dimension_semantics=("parallel",)),
    )(x, *flat_params)

    return out[:B, :1]


# ---------------------------------------------------------------------------
# Init & references
# ---------------------------------------------------------------------------
def init_params(key, input_dim):
    """Mimics torch.nn.Linear default init: U(-1/sqrt(in), 1/sqrt(in))."""
    params = []
    in_dim = input_dim
    for out_dim in LAYER_DIMS:
        key, kw, kb = jax.random.split(key, 3)
        bound = 1.0 / jnp.sqrt(jnp.float32(in_dim))
        w = jax.random.uniform(kw, (in_dim, out_dim), jnp.float32, -bound, bound)
        b = jax.random.uniform(kb, (1, out_dim), jnp.float32, -bound, bound)
        params.append((w, b))
        in_dim = out_dim
    return params


def reference_forward_f32(x, params):
    """Exact f32 replica of the PyTorch forward (no fusion, no bf16)."""
    h = x
    for layer_idx, (w, b) in enumerate(params):
        h = h @ w + b
        if 1 <= layer_idx <= 4:        # relu on l2..l5 only
            h = jnp.maximum(h, 0.0)
    return h


def reference_forward_bf16(x, kparams):
    """Replays the exact kernel math (fused/padded/bf16) with plain XLA ops."""
    h = x.astype(jnp.bfloat16)
    n = len(kparams)
    for idx, (w, b) in enumerate(kparams):
        z = jnp.dot(h, w, preferred_element_type=jnp.float32) + b
        h = jnp.maximum(z, 0.0).astype(jnp.bfloat16) if idx < n - 1 else z
    return h[:, :1]


if __name__ == "__main__":
    input_dim = 32
    batch = 16

    key = jax.random.PRNGKey(0)
    key, kx = jax.random.split(key)
    x = jax.random.normal(kx, (batch, input_dim), jnp.float32)
    params = init_params(key, input_dim)
    kparams = prepare_params(params)

    # Small-batch run (single grid step).
    out = jax.block_until_ready(dnn_classifier_forward(x, kparams))
    assert out.shape == (batch, 1), out.shape

    ref_exact = reference_forward_bf16(x, kparams)
    assert jnp.allclose(out, ref_exact, atol=1e-3, rtol=1e-3), (
        float(jnp.max(jnp.abs(out - ref_exact))))

    ref_f32 = reference_forward_f32(x, params)
    assert jnp.allclose(out, ref_f32, atol=5e-2, rtol=5e-2), (
        float(jnp.max(jnp.abs(out - ref_f32))))

    # Larger, non-tile-aligned batch: exercises padding + multi-step parallel grid.
    B2 = 4000
    key, kx2 = jax.random.split(key)
    x2 = jax.random.normal(kx2, (B2, input_dim), jnp.float32)
    out2 = jax.block_until_ready(
        dnn_classifier_forward(x2, kparams, tile_m=2048, row_chunk=256))
    assert out2.shape == (B2, 1), out2.shape
    ref2 = reference_forward_bf16(x2, kparams)
    assert jnp.allclose(out2, ref2, atol=1e-3, rtol=1e-3), (
        float(jnp.max(jnp.abs(out2 - ref2))))

    print("KERNEL_OK")
</pallas_src>

<mosaic_0001>
module attributes {stable_mosaic.version = 11 : i64} {
  func.func @_mlp_kernel(%arg0: i32, %arg1: memref<16x32xf32, #tpu.memory_space<vmem>>, %arg2: memref<32x128xbf16, #tpu.memory_space<vmem>>, %arg3: memref<1x128xf32, #tpu.memory_space<vmem>>, %arg4: memref<128x128xbf16, #tpu.memory_space<vmem>>, %arg5: memref<1x128xf32, #tpu.memory_space<vmem>>, %arg6: memref<128x128xbf16, #tpu.memory_space<vmem>>, %arg7: memref<1x128xf32, #tpu.memory_space<vmem>>, %arg8: memref<128x128xbf16, #tpu.memory_space<vmem>>, %arg9: memref<1x128xf32, #tpu.memory_space<vmem>>, %arg10: memref<128x128xbf16, #tpu.memory_space<vmem>>, %arg11: memref<1x128xf32, #tpu.memory_space<vmem>>, %arg12: memref<16x128xf32, #tpu.memory_space<vmem>>) attributes {dimension_semantics = [#tpu.dimension_semantics<parallel>], iteration_bounds = array<i64: 1>, scalar_prefetch = 0 : i64, scratch_operands = 0 : i64, tpu.core_type = #tpu.core_type<tc>, window_params = [{transform_indices = @transform_0, window_bounds = array<i64: 16, 32>}, {pipeline_mode = #tpu.pipeline_mode<synchronous>, transform_indices = @transform_1, window_bounds = array<i64: 32, 128>}, {pipeline_mode = #tpu.pipeline_mode<synchronous>, transform_indices = @transform_2, window_bounds = array<i64: 1, 128>}, {pipeline_mode = #tpu.pipeline_mode<synchronous>, transform_indices = @transform_3, window_bounds = array<i64: 128, 128>}, {pipeline_mode = #tpu.pipeline_mode<synchronous>, transform_indices = @transform_4, window_bounds = array<i64: 1, 128>}, {pipeline_mode = #tpu.pipeline_mode<synchronous>, transform_indices = @transform_5, window_bounds = array<i64: 128, 128>}, {pipeline_mode = #tpu.pipeline_mode<synchronous>, transform_indices = @transform_6, window_bounds = array<i64: 1, 128>}, {pipeline_mode = #tpu.pipeline_mode<synchronous>, transform_indices = @transform_7, window_bounds = array<i64: 128, 128>}, {pipeline_mode = #tpu.pipeline_mode<synchronous>, transform_indices = @transform_8, window_bounds = array<i64: 1, 128>}, {pipeline_mode = #tpu.pipeline_mode<synchronous>, transform_indices = @transform_9, window_bounds = array<i64: 128, 128>}, {pipeline_mode = #tpu.pipeline_mode<synchronous>, transform_indices = @transform_10, window_bounds = array<i64: 1, 128>}, {transform_indices = @transform_11, window_bounds = array<i64: 16, 128>}]} {
    %c0 = arith.constant 0 : index
    %c0_0 = arith.constant 0 : index
    %0 = vector.load %arg2[%c0, %c0_0] : memref<32x128xbf16, #tpu.memory_space<vmem>>, vector<32x128xbf16>
    %c0_1 = arith.constant 0 : index
    %c0_2 = arith.constant 0 : index
    %1 = vector.load %arg4[%c0_1, %c0_2] : memref<128x128xbf16, #tpu.memory_space<vmem>>, vector<128x128xbf16>
    %c0_3 = arith.constant 0 : index
    %c0_4 = arith.constant 0 : index
    %2 = vector.load %arg6[%c0_3, %c0_4] : memref<128x128xbf16, #tpu.memory_space<vmem>>, vector<128x128xbf16>
    %c0_5 = arith.constant 0 : index
    %c0_6 = arith.constant 0 : index
    %3 = vector.load %arg8[%c0_5, %c0_6] : memref<128x128xbf16, #tpu.memory_space<vmem>>, vector<128x128xbf16>
    %c0_7 = arith.constant 0 : index
    %c0_8 = arith.constant 0 : index
    %4 = vector.load %arg10[%c0_7, %c0_8] : memref<128x128xbf16, #tpu.memory_space<vmem>>, vector<128x128xbf16>
    %c0_9 = arith.constant 0 : index
    %c0_10 = arith.constant 0 : index
    %5 = vector.load %arg3[%c0_9, %c0_10] : memref<1x128xf32, #tpu.memory_space<vmem>>, vector<1x128xf32>
    %c0_11 = arith.constant 0 : index
    %c0_12 = arith.constant 0 : index
    %6 = vector.load %arg5[%c0_11, %c0_12] : memref<1x128xf32, #tpu.memory_space<vmem>>, vector<1x128xf32>
    %c0_13 = arith.constant 0 : index
    %c0_14 = arith.constant 0 : index
    %7 = vector.load %arg7[%c0_13, %c0_14] : memref<1x128xf32, #tpu.memory_space<vmem>>, vector<1x128xf32>
    %c0_15 = arith.constant 0 : index
    %c0_16 = arith.constant 0 : index
    %8 = vector.load %arg9[%c0_15, %c0_16] : memref<1x128xf32, #tpu.memory_space<vmem>>, vector<1x128xf32>
    %c0_17 = arith.constant 0 : index
    %c0_18 = arith.constant 0 : index
    %9 = vector.load %arg11[%c0_17, %c0_18] : memref<1x128xf32, #tpu.memory_space<vmem>>, vector<1x128xf32>
    %c0_i32 = arith.constant 0 : i32
    %10 = tpu.assume_multiple %c0_i32, 16 : i32
    %11 = arith.index_cast %10 : i32 to index
    %c0_19 = arith.constant 0 : index
    %12 = vector.load %arg1[%11, %c0_19] : memref<16x32xf32, #tpu.memory_space<vmem>>, vector<16x32xf32>
    %13 = arith.truncf %12 : vector<16x32xf32> to vector<16x32xbf16>
    %cst = arith.constant dense<0.000000e+00> : vector<16x128xf32>
    %14 = tpu.matmul %13, %0, %cst {dimension_numbers = #tpu.dot_dimension_numbers<[1], [0], [0], [1], [0, 0, 1, 1], [], []>} : vector<16x32xbf16>, vector<32x128xbf16>, vector<16x128xf32> -> vector<16x128xf32>
    %15 = vector.broadcast %5 : vector<1x128xf32> to vector<16x128xf32>
    %16 = arith.addf %14, %15 : vector<16x128xf32>
    %cst_20 = arith.constant 0.000000e+00 : f32
    %17 = vector.broadcast %cst_20 : f32 to vector<16x128xf32>
    %18 = arith.maximumf %16, %17 : vector<16x128xf32>
    %19 = arith.truncf %18 : vector<16x128xf32> to vector<16x128xbf16>
    %cst_21 = arith.constant dense<0.000000e+00> : vector<16x128xf32>
    %20 = tpu.matmul %19, %1, %cst_21 {dimension_numbers = #tpu.dot_dimension_numbers<[1], [0], [0], [1], [0, 0, 1, 1], [], []>} : vector<16x128xbf16>, vector<128x128xbf16>, vector<16x128xf32> -> vector<16x128xf32>
    %21 = vector.broadcast %6 : vector<1x128xf32> to vector<16x128xf32>
    %22 = arith.addf %20, %21 : vector<16x128xf32>
    %cst_22 = arith.constant 0.000000e+00 : f32
    %23 = vector.broadcast %cst_22 : f32 to vector<16x128xf32>
    %24 = arith.maximumf %22, %23 : vector<16x128xf32>
    %25 = arith.truncf %24 : vector<16x128xf32> to vector<16x128xbf16>
    %cst_23 = arith.constant dense<0.000000e+00> : vector<16x128xf32>
    %26 = tpu.matmul %25, %2, %cst_23 {dimension_numbers = #tpu.dot_dimension_numbers<[1], [0], [0], [1], [0, 0, 1, 1], [], []>} : vector<16x128xbf16>, vector<128x128xbf16>, vector<16x128xf32> -> vector<16x128xf32>
    %27 = vector.broadcast %7 : vector<1x128xf32> to vector<16x128xf32>
    %28 = arith.addf %26, %27 : vector<16x128xf32>
    %cst_24 = arith.constant 0.000000e+00 : f32
    %29 = vector.broadcast %cst_24 : f32 to vector<16x128xf32>
    %30 = arith.maximumf %28, %29 : vector<16x128xf32>
    %31 = arith.truncf %30 : vector<16x128xf32> to vector<16x128xbf16>
    %cst_25 = arith.constant dense<0.000000e+00> : vector<16x128xf32>
    %32 = tpu.matmul %31, %3, %cst_25 {dimension_numbers = #tpu.dot_dimension_numbers<[1], [0], [0], [1], [0, 0, 1, 1], [], []>} : vector<16x128xbf16>, vector<128x128xbf16>, vector<16x128xf32> -> vector<16x128xf32>
    %33 = vector.broadcast %8 : vector<1x128xf32> to vector<16x128xf32>
    %34 = arith.addf %32, %33 : vector<16x128xf32>
    %cst_26 = arith.constant 0.000000e+00 : f32
    %35 = vector.broadcast %cst_26 : f32 to vector<16x128xf32>
    %36 = arith.maximumf %34, %35 : vector<16x128xf32>
    %37 = arith.truncf %36 : vector<16x128xf32> to vector<16x128xbf16>
    %cst_27 = arith.constant dense<0.000000e+00> : vector<16x128xf32>
    %38 = tpu.matmul %37, %4, %cst_27 {dimension_numbers = #tpu.dot_dimension_numbers<[1], [0], [0], [1], [0, 0, 1, 1], [], []>} : vector<16x128xbf16>, vector<128x128xbf16>, vector<16x128xf32> -> vector<16x128xf32>
    %39 = vector.broadcast %9 : vector<1x128xf32> to vector<16x128xf32>
    %40 = arith.addf %38, %39 : vector<16x128xf32>
    %41 = arith.index_cast %10 : i32 to index
    %c0_28 = arith.constant 0 : index
    %42 = vector.load %arg12[%41, %c0_28] : memref<16x128xf32, #tpu.memory_space<vmem>>, vector<16x128xf32>
    tpu.vector_store %arg12[%41, %c0_28], %40 {strides = array<i32>} : memref<16x128xf32, #tpu.memory_space<vmem>>, vector<16x128xf32>,
    return
  }
  func.func @transform_0(%arg0: i32) -> (i32, i32) {
    %c0_i32 = arith.constant 0 : i32
    %c0_i32_0 = arith.constant 0 : i32
    return %arg0, %c0_i32 : i32, i32
  }
  func.func @transform_1(%arg0: i32) -> (i32, i32) {
    %c0_i32 = arith.constant 0 : i32
    %c0_i32_0 = arith.constant 0 : i32
    %c0_i32_1 = arith.constant 0 : i32
    return %c0_i32, %c0_i32_0 : i32, i32
  }
  func.func @transform_2(%arg0: i32) -> (i32, i32) {
    %c0_i32 = arith.constant 0 : i32
    %c0_i32_0 = arith.constant 0 : i32
    %c0_i32_1 = arith.constant 0 : i32
    return %c0_i32, %c0_i32_0 : i32, i32
  }
  func.func @transform_3(%arg0: i32) -> (i32, i32) {
    %c0_i32 = arith.constant 0 : i32
    %c0_i32_0 = arith.constant 0 : i32
    %c0_i32_1 = arith.constant 0 : i32
    return %c0_i32, %c0_i32_0 : i32, i32
  }
  func.func @transform_4(%arg0: i32) -> (i32, i32) {
    %c0_i32 = arith.constant 0 : i32
    %c0_i32_0 = arith.constant 0 : i32
    %c0_i32_1 = arith.constant 0 : i32
    return %c0_i32, %c0_i32_0 : i32, i32
  }
  func.func @transform_5(%arg0: i32) -> (i32, i32) {
    %c0_i32 = arith.constant 0 : i32
    %c0_i32_0 = arith.constant 0 : i32
    %c0_i32_1 = arith.constant 0 : i32
    return %c0_i32, %c0_i32_0 : i32, i32
  }
  func.func @transform_6(%arg0: i32) -> (i32, i32) {
    %c0_i32 = arith.constant 0 : i32
    %c0_i32_0 = arith.constant 0 : i32
    %c0_i32_1 = arith.constant 0 : i32
    return %c0_i32, %c0_i32_0 : i32, i32
  }
  func.func @transform_7(%arg0: i32) -> (i32, i32) {
    %c0_i32 = arith.constant 0 : i32
    %c0_i32_0 = arith.constant 0 : i32
    %c0_i32_1 = arith.constant 0 : i32
    return %c0_i32, %c0_i32_0 : i32, i32
  }
  func.func @transform_8(%arg0: i32) -> (i32, i32) {
    %c0_i32 = arith.constant 0 : i32
    %c0_i32_0 = arith.constant 0 : i32
    %c0_i32_1 = arith.constant 0 : i32
    return %c0_i32, %c0_i32_0 : i32, i32
  }
  func.func @transform_9(%arg0: i32) -> (i32, i32) {
    %c0_i32 = arith.constant 0 : i32
    %c0_i32_0 = arith.constant 0 : i32
    %c0_i32_1 = arith.constant 0 : i32
    return %c0_i32, %c0_i32_0 : i32, i32
  }
  func.func @transform_10(%arg0: i32) -> (i32, i32) {
    %c0_i32 = arith.constant 0 : i32
    %c0_i32_0 = arith.constant 0 : i32
    %c0_i32_1 = arith.constant 0 : i32
    return %c0_i32, %c0_i32_0 : i32, i32
  }
  func.func @transform_11(%arg0: i32) -> (i32, i32) {
    %c0_i32 = arith.constant 0 : i32
    %c0_i32_0 = arith.constant 0 : i32
    return %arg0, %c0_i32 : i32, i32
  }
}

</mosaic_0001>

<llo_original>
// kernel: tpu_custom_call.1
$region0: #{tpu_custom_call.1}
  #allocation0 [shape = 'u32[]', space=smem, size = 0x4, offset = 0x4, fixed_abs, tag = 'smem constant byte address 0x4 - core index']
  #allocation1 [shape = 'u32[144,128]{1,0:T(1,128)}', space=vmem, size = 0x12000, scoped, tag = 'internal scratch']
  %s0 = inlined_call_operand.hbm [shape: f32[16,32], index: 0, kind: input, shape index: {}]
  %s1 = inlined_call_operand.hbm [shape: bf16[32,128], index: 1, kind: input, shape index: {}]
  %s2 = inlined_call_operand.vmem [shape: f32[1,128], index: 2, kind: input, shape index: {}]
  %s3 = inlined_call_operand.hbm [shape: bf16[128,128], index: 3, kind: input, shape index: {}]
  %s4 = inlined_call_operand.vmem [shape: f32[1,128], index: 4, kind: input, shape index: {}]
  %s5 = inlined_call_operand.hbm [shape: bf16[128,128], index: 5, kind: input, shape index: {}]
  %s6 = inlined_call_operand.vmem [shape: f32[1,128], index: 6, kind: input, shape index: {}]
  %s7 = inlined_call_operand.hbm [shape: bf16[128,128], index: 7, kind: input, shape index: {}]
  %s8 = inlined_call_operand.vmem [shape: f32[1,128], index: 8, kind: input, shape index: {}]
  %s9 = inlined_call_operand.hbm [shape: bf16[128,128], index: 9, kind: input, shape index: {}]
  %s10 = inlined_call_operand.vmem [shape: f32[1,128], index: 10, kind: input, shape index: {}]
  %s11 = inlined_call_operand.hbm [shape: f32[16,128], index: 11, kind: output, shape index: {}]
  %s12 = sld [smem:[#allocation0]]
  $region78: #{tpu_custom_call.1} parent=0
    _
  %s14 = ssub.s32 1, %s12
  %s15 = scalar_select 0, %s14, %s12
  $region1: #{tpu_custom_call.1} parent=0
    #allocation2 [shape = 'u8[8192]{0}', space=vmem, size = 0x2000, scoped, tag = 'input window, operand 0, single buffered']
    #allocation3 [shape = 's32[1]{0}', space=sflag, size = 0x4, scoped, tag = 'scoped memory for tpu_custom_call.1']
    #allocation4 [shape = 's32[1]{0}', space=sflag, size = 0x4, scoped, tag = 'scoped memory for tpu_custom_call.1']
    #allocation5 [shape = 'u8[8192]{0}', space=vmem, size = 0x2000, scoped, tag = 'input window, operand 1, single buffered']
    #allocation6 [shape = 's32[1]{0}', space=sflag, size = 0x4, scoped, tag = 'scoped memory for tpu_custom_call.1']
    #allocation7 [shape = 'u8[32768]{0}', space=vmem, size = 0x8000, scoped, tag = 'input window, operand 3, single buffered']
    #allocation8 [shape = 'u8[32768]{0}', space=vmem, size = 0x8000, scoped, tag = 'input window, operand 5, single buffered']
    #allocation9 [shape = 's32[1]{0}', space=sflag, size = 0x4, scoped, tag = 'scoped memory for tpu_custom_call.1']
    #allocation10 [shape = 'u8[32768]{0}', space=vmem, size = 0x8000, scoped, tag = 'input window, operand 7, single buffered']
    #allocation11 [shape = 'u8[32768]{0}', space=vmem, size = 0x8000, scoped, tag = 'input window, operand 9, single buffered']
    #allocation12 [shape = 's32[1]{0}', space=sflag, size = 0x4, scoped, tag = 'scoped memory for tpu_custom_call.1']
    #allocation13 [shape = 'u8[8192]{0}', space=vmem, size = 0x2000, scoped, tag = 'output window, operand 0, single buffered']
    %16 = vsyncpa [#allocation3], 0
    %17 = vsyncpa [#allocation6], 0
    %18 = vsyncpa [#allocation9], 0
    %19 = vsyncpa [#allocation12], 0
    %20 = vsyncpa [#allocation4], 0
    // Predicated region
    $region2: #{tpu_custom_call.1} parent=1 // pred_check
      _
    $region3: #{tpu_custom_call.1} parent=1 // pred_check_branch
      %22 = sbr.rel (0) target = $region5
    $region4: #{tpu_custom_call.1} parent=1 // pred_region
      %s24 = ssub.s32 256, 256
      %25 = vsyncadd [#allocation3], %s24
      %s26 = sshll.u32 [#allocation2], 4
      %s27 = int_to_ptr.vmem [resolvable:$true] %s26
      %32 = dma.hbm_to_vmem [thread:$0]  %s0, 256, %s27, [#allocation3], 128, 128, 8
    $region5: #{tpu_custom_call.1} parent=1 // pred_fallthru
      _
    // Predicated region
    $region6: #{tpu_custom_call.1} parent=1 // pred_check
      _
    $region7: #{tpu_custom_call.1} parent=1 // pred_check_branch
      %34 = sbr.rel (0) target = $region9
    $region8: #{tpu_custom_call.1} parent=1 // pred_region
      %s36 = ssub.s32 256, 256
      %37 = vsyncadd [#allocation6], %s36
      %s38 = sshll.u32 [#allocation5], 4
      %s39 = int_to_ptr.vmem [resolvable:$true] %s38
      %44 = dma.hbm_to_vmem [thread:$0]  %s1, 256, %s39, [#allocation6], 64, 64, 4
    $region9: #{tpu_custom_call.1} parent=1 // pred_fallthru
      _
    // Predicated region
    $region10: #{tpu_custom_call.1} parent=1 // pred_check
      _
    $region11: #{tpu_custom_call.1} parent=1 // pred_check_branch
      %46 = sbr.rel (0) target = $region13
    $region12: #{tpu_custom_call.1} parent=1 // pred_region
      _
    $region13: #{tpu_custom_call.1} parent=1 // pred_fallthru
      _
    // Predicated region
    $region14: #{tpu_custom_call.1} parent=1 // pred_check
      _
    $region15: #{tpu_custom_call.1} parent=1 // pred_check_branch
      %48 = sbr.rel (0) target = $region17
    $region16: #{tpu_custom_call.1} parent=1 // pred_region
      %s50 = ssub.s32 1024, 1024
      %51 = vsyncadd [#allocation6], %s50
      %s52 = sshll.u32 [#allocation7], 4
      %s53 = int_to_ptr.vmem [resolvable:$true] %s52
      %58 = dma.hbm_to_vmem [thread:$0]  %s3, 1024, %s53, [#allocation6], 64, 64, 4
    $region17: #{tpu_custom_call.1} parent=1 // pred_fallthru
      _
    // Predicated region
    $region18: #{tpu_custom_call.1} parent=1 // pred_check
      _
    $region19: #{tpu_custom_call.1} parent=1 // pred_check_branch
      %60 = sbr.rel (0) target = $region21
    $region20: #{tpu_custom_call.1} parent=1 // pred_region
      _
    $region21: #{tpu_custom_call.1} parent=1 // pred_fallthru
      _
    // Predicated region
    $region22: #{tpu_custom_call.1} parent=1 // pred_check
      _
    $region23: #{tpu_custom_call.1} parent=1 // pred_check_branch
      %62 = sbr.rel (0) target = $region25
    $region24: #{tpu_custom_call.1} parent=1 // pred_region
      %s64 = ssub.s32 1024, 1024
      %65 = vsyncadd [#allocation9], %s64
      %s66 = sshll.u32 [#allocation8], 4
      %s67 = int_to_ptr.vmem [resolvable:$true] %s66
      %72 = dma.hbm_to_vmem [thread:$0]  %s5, 1024, %s67, [#allocation9], 64, 64, 4
    $region25: #{tpu_custom_call.1} parent=1 // pred_fallthru
      _
    // Predicated region
    $region26: #{tpu_custom_call.1} parent=1 // pred_check
      _
    $region27: #{tpu_custom_call.1} parent=1 // pred_check_branch
      %74 = sbr.rel (0) target = $region29
    $region28: #{tpu_custom_call.1} parent=1 // pred_region
      _
    $region29: #{tpu_custom_call.1} parent=1 // pred_fallthru
      _
    // Predicated region
    $region30: #{tpu_custom_call.1} parent=1 // pred_check
      _
    $region31: #{tpu_custom_call.1} parent=1 // pred_check_branch
      %76 = sbr.rel (0) target = $region33
    $region32: #{tpu_custom_call.1} parent=1 // pred_region
      %s78 = ssub.s32 1024, 1024
      %79 = vsyncadd [#allocation9], %s78
      %s80 = sshll.u32 [#allocation10], 4
      %s81 = int_to_ptr.vmem [resolvable:$true] %s80
      %86 = dma.hbm_to_vmem [thread:$0]  %s7, 1024, %s81, [#allocation9], 64, 64, 4
    $region33: #{tpu_custom_call.1} parent=1 // pred_fallthru
      _
    // Predicated region
    $region34: #{tpu_custom_call.1} parent=1 // pred_check
      _
    $region35: #{tpu_custom_call.1} parent=1 // pred_check_branch
      %88 = sbr.rel (0) target = $region37
    $region36: #{tpu_custom_call.1} parent=1 // pred_region
      _
    $region37: #{tpu_custom_call.1} parent=1 // pred_fallthru
      _
    // Predicated region
    $region38: #{tpu_custom_call.1} parent=1 // pred_check
      _
    $region39: #{tpu_custom_call.1} parent=1 // pred_check_branch
      %90 = sbr.rel (0) target = $region41
    $region40: #{tpu_custom_call.1} parent=1 // pred_region
      %s92 = ssub.s32 1024, 1024
      %93 = vsyncadd [#allocation12], %s92
      %s94 = sshll.u32 [#allocation11], 4
      %s95 = int_to_ptr.vmem [resolvable:$true] %s94
      %100 = dma.hbm_to_vmem [thread:$0]  %s9, 1024, %s95, [#allocation12], 64, 64, 4
    $region41: #{tpu_custom_call.1} parent=1 // pred_fallthru
      _
    // Predicated region
    $region42: #{tpu_custom_call.1} parent=1 // pred_check
      _
    $region43: #{tpu_custom_call.1} parent=1 // pred_check_branch
      %102 = sbr.rel (0) target = $region45
    $region44: #{tpu_custom_call.1} parent=1 // pred_region
      _
    $region45: #{tpu_custom_call.1} parent=1 // pred_fallthru
      _
    // Predicated region
    $region46: #{tpu_custom_call.1} parent=1 // pred_check
      _
    $region47: #{tpu_custom_call.1} parent=1 // pred_check_branch
      %104 = sbr.rel (0) target = $region49
    $region48: #{tpu_custom_call.1} parent=1 // pred_region
      %105 = dma.done [#allocation3], 256
    $region49: #{tpu_custom_call.1} parent=1 // pred_fallthru
      _
    // Predicated region
    $region50: #{tpu_custom_call.1} parent=1 // pred_check
      _
    $region51: #{tpu_custom_call.1} parent=1 // pred_check_branch
      %107 = sbr.rel (0) target = $region53
    $region52: #{tpu_custom_call.1} parent=1 // pred_region
      %108 = dma.done [#allocation6], 256
    $region53: #{tpu_custom_call.1} parent=1 // pred_fallthru
      _
    // Predicated region
    $region54: #{tpu_custom_call.1} parent=1 // pred_check
      _
    $region55: #{tpu_custom_call.1} parent=1 // pred_check_branch
      %110 = sbr.rel (0) target = $region57
    $region56: #{tpu_custom_call.1} parent=1 // pred_region
      %111 = dma.done [#allocation6], 1024
    $region57: #{tpu_custom_call.1} parent=1 // pred_fallthru
      _
    // Predicated region
    $region58: #{tpu_custom_call.1} parent=1 // pred_check
      _
    $region59: #{tpu_custom_call.1} parent=1 // pred_check_branch
      %113 = sbr.rel (0) target = $region61
    $region60: #{tpu_custom_call.1} parent=1 // pred_region
      %114 = dma.done [#allocation9], 1024
    $region61: #{tpu_custom_call.1} parent=1 // pred_fallthru
      _
    // Predicated region
    $region62: #{tpu_custom_call.1} parent=1 // pred_check
      _
    $region63: #{tpu_custom_call.1} parent=1 // pred_check_branch
      %116 = sbr.rel (0) target = $region65
    $region64: #{tpu_custom_call.1} parent=1 // pred_region
      %117 = dma.done [#allocation9], 1024
    $region65: #{tpu_custom_call.1} parent=1 // pred_fallthru
      _
    // Predicated region
    $region66: #{tpu_custom_call.1} parent=1 // pred_check
      _
    $region67: #{tpu_custom_call.1} parent=1 // pred_check_branch
      %119 = sbr.rel (0) target = $region69
    $region68: #{tpu_custom_call.1} parent=1 // pred_region
      %120 = dma.done [#allocation12], 1024
    $region69: #{tpu_custom_call.1} parent=1 // pred_fallthru
      _
    %v122 = vld [vmem:[#allocation5] sm:$0xf]
    %v123 = vld [vmem:[#allocation5 + $0x4] sm:$0xf]
    %v124 = vld [vmem:[#allocation5 + $0x8] sm:$0xf]
    %v125 = vld [vmem:[#allocation5 + $0xc] sm:$0xf]
    %v126 = vld [vmem:[#allocation7] sm:$0xf]
    %v127 = vld [vmem:[#allocation7 + $0x4] sm:$0xf]
    %v128 = vld [vmem:[#allocation7 + $0x8] sm:$0xf]
    %v129 = vld [vmem:[#allocation7 + $0xc] sm:$0xf]
    %v130 = vld [vmem:[#allocation7 + $0x10] sm:$0xf]
    %v131 = vld [vmem:[#allocation7 + $0x14] sm:$0xf]
    %v132 = vld [vmem:[#allocation7 + $0x18] sm:$0xf]
    %v133 = vld [vmem:[#allocation7 + $0x1c] sm:$0xf]
    %v134 = vld [vmem:[#allocation7 + $0x20] sm:$0xf]
    %v135 = vld [vmem:[#allocation7 + $0x24] sm:$0xf]
    %v136 = vld [vmem:[#allocation7 + $0x28] sm:$0xf]
    %v137 = vld [vmem:[#allocation7 + $0x2c] sm:$0xf]
    %v138 = vld [vmem:[#allocation7 + $0x30] sm:$0xf]
    %v139 = vld [vmem:[#allocation7 + $0x34] sm:$0xf]
    %v140 = vld [vmem:[#allocation7 + $0x38] sm:$0xf]
    %v141 = vld [vmem:[#allocation7 + $0x3c] sm:$0xf]
    %v142 = vld [vmem:[#allocation8] sm:$0xf]
    %v143 = vld [vmem:[#allocation8 + $0x4] sm:$0xf]
    %v144 = vld [vmem:[#allocation8 + $0x8] sm:$0xf]
    %v145 = vld [vmem:[#allocation8 + $0xc] sm:$0xf]
    %v146 = vld [vmem:[#allocation8 + $0x10] sm:$0xf]
    %v147 = vld [vmem:[#allocation8 + $0x14] sm:$0xf]
    %v148 = vld [vmem:[#allocation8 + $0x18] sm:$0xf]
    %v149 = vld [vmem:[#allocation8 + $0x1c] sm:$0xf]
    %v150 = vld [vmem:[#allocation8 + $0x20] sm:$0xf]
    %v151 = vld [vmem:[#allocation8 + $0x24] sm:$0xf]
    %v152 = vld [vmem:[#allocation8 + $0x28] sm:$0xf]
    %v153 = vld [vmem:[#allocation8 + $0x2c] sm:$0xf]
    %v154 = vld [vmem:[#allocation8 + $0x30] sm:$0xf]
    %v155 = vld [vmem:[#allocation8 + $0x34] sm:$0xf]
    %v156 = vld [vmem:[#allocation8 + $0x38] sm:$0xf]
    %v157 = vld [vmem:[#allocation8 + $0x3c] sm:$0xf]
    %v158 = vld [vmem:[#allocation10] sm:$0xf]
    %v159 = vld [vmem:[#allocation10 + $0x4] sm:$0xf]
    %v160 = vld [vmem:[#allocation10 + $0x8] sm:$0xf]
    %v161 = vld [vmem:[#allocation10 + $0xc] sm:$0xf]
    %v162 = vld [vmem:[#allocation10 + $0x10] sm:$0xf]
    %v163 = vld [vmem:[#allocation10 + $0x14] sm:$0xf]
    %v164 = vld [vmem:[#allocation10 + $0x18] sm:$0xf]
    %v165 = vld [vmem:[#allocation10 + $0x1c] sm:$0xf]
    %v166 = vld [vmem:[#allocation10 + $0x20] sm:$0xf]
    %v167 = vld [vmem:[#allocation10 + $0x24] sm:$0xf]
    %v168 = vld [vmem:[#allocation10 + $0x28] sm:$0xf]
    %v169 = vld [vmem:[#allocation10 + $0x2c] sm:$0xf]
    %v170 = vld [vmem:[#allocation10 + $0x30] sm:$0xf]
    %v171 = vld [vmem:[#allocation10 + $0x34] sm:$0xf]
    %v172 = vld [vmem:[#allocation10 + $0x38] sm:$0xf]
    %v173 = vld [vmem:[#allocation10 + $0x3c] sm:$0xf]
    %v174 = vld [vmem:[#allocation11] sm:$0xf]
    %v175 = vld [vmem:[#allocation11 + $0x4] sm:$0xf]
    %v176 = vld [vmem:[#allocation11 + $0x8] sm:$0xf]
    %v177 = vld [vmem:[#allocation11 + $0xc] sm:$0xf]
    %v178 = vld [vmem:[#allocation11 + $0x10] sm:$0xf]
    %v179 = vld [vmem:[#allocation11 + $0x14] sm:$0xf]
    %v180 = vld [vmem:[#allocation11 + $0x18] sm:$0xf]
    %v181 = vld [vmem:[#allocation11 + $0x1c] sm:$0xf]
    %v182 = vld [vmem:[#allocation11 + $0x20] sm:$0xf]
    %v183 = vld [vmem:[#allocation11 + $0x24] sm:$0xf]
    %v184 = vld [vmem:[#allocation11 + $0x28] sm:$0xf]
    %v185 = vld [vmem:[#allocation11 + $0x2c] sm:$0xf]
    %v186 = vld [vmem:[#allocation11 + $0x30] sm:$0xf]
    %v187 = vld [vmem:[#allocation11 + $0x34] sm:$0xf]
    %v188 = vld [vmem:[#allocation11 + $0x38] sm:$0xf]
    %v189 = vld [vmem:[#allocation11 + $0x3c] sm:$0xf]
    %v190 = vld [vmem:[%s2] sm:$0x1]
    %v191 = vld [vmem:[%s4] sm:$0x1]
    %v192 = vld [vmem:[%s6] sm:$0x1]
    %v193 = vld [vmem:[%s8] sm:$0x1]
    %v194 = vld [vmem:[%s10] sm:$0x1]
    %v195 = vld [vmem:[#allocation2] sm:$0xff]
    %v196 = vld [vmem:[#allocation2 + $0x8] sm:$0xff]
    %v197 = vpack.c.bf16 %v196, %v195
    %v199 = vlaneseq
    %v200 = vshrl.u32 %v199, 7
    %v201 = vsub.s32 0, %v200
    %v202 = vrot.slane %v190, %v201
    %v208 = vunpack.c.l.b16 %v122
    %v209 = vunpack.c.l.b16 %v123
    %v210 = vunpack.c.l.b16 %v124
    %v211 = vunpack.c.l.b16 %v125
    %v212 = vpack.c.b16 %v209, %v208
    %v213 = vpack.c.b16 %v211, %v210
    %vm216 = vcmask 261120
    %v218 = vsel %vm216, %v197, 0
    %220 = vmatprep.subr.bf16.mxu0 0
    %221 = vmatpush1.bf16.msra.mxu0 %v212
    %222 = vmatprep.subr.bf16.mxu0 0
    %223 = vmatpush1.bf16.msra.mxu0 %v213
    %224 = vmatprep.subr.bf16.mxu0 0
    %225 = vmatpush1.bf16.msra.mxu0 0
    %226 = vmatprep.subr.bf16.mxu0 0
    %227 = vmatpush1.bf16.msra.mxu0 0
    %228 = vmatprep.subr.bf16.mxu0 0
    %229 = vmatpush1.bf16.msra.mxu0 0
    %230 = vmatprep.subr.bf16.mxu0 0
    %231 = vmatpush1.bf16.msra.mxu0 0
    %232 = vmatprep.subr.bf16.mxu0 0
    %233 = vmatpush1.bf16.msra.mxu0 0
    %234 = vmatprep.subr.bf16.mxu0 0
    %235 = vmatpush1.bf16.msra.mxu0 0
    %236 = vmatprep.subr.bf16.mxu0 0
    %237 = vmatpush1.bf16.msra.mxu0 0
    %238 = vmatprep.subr.bf16.mxu0 0
    %239 = vmatpush1.bf16.msra.mxu0 0
    %240 = vmatprep.subr.bf16.mxu0 0
    %241 = vmatpush1.bf16.msra.mxu0 0
    %242 = vmatprep.subr.bf16.mxu0 0
    %243 = vmatpush1.bf16.msra.mxu0 0
    %244 = vmatprep.subr.bf16.mxu0 0
    %245 = vmatpush1.bf16.msra.mxu0 0
    %246 = vmatprep.subr.bf16.mxu0 0
    %247 = vmatpush1.bf16.msra.mxu0 0
    %248 = vmatprep.subr.bf16.mxu0 0
    %249 = vmatpush1.bf16.msra.mxu0 0
    %250 = vmatprep.subr.bf16.mxu0 0
    %251 = vmatpush1.bf16.msra.mxu0 0
    %252 = vmatprep.mubr.bf16.mxu0 0
    %253 = vmatmul.mubr.bf16.gmra.mrb[0].mxu0 %v218
    %v254 = vpop.f32.mrb[0].mxu0
    %v255 = vadd.f32 %v202, %v254
    %v256 = vpop.f32.mrb[0].mxu0
    %v257 = vpop.f32.mrb[0].mxu0
    %v258 = vadd.f32 %v202, %v257
    %v259 = vpop.f32.mrb[0].mxu0
    %260 = vdwg.mxu0
    %v261 = vmax.f32 %v255, 0.0
    %v262 = vmax.f32 %v258, 0.0
    %v263 = vpack.c.bf16 %v262, %v261
    %v265 = vlaneseq
    %v266 = vshrl.u32 %v265, 7
    %v267 = vsub.s32 0, %v266
    %v268 = vrot.slane %v191, %v267
    %v286 = vunpack.c.l.b16 %v126
    %v287 = vunpack.c.l.b16 %v127
    %v288 = vunpack.c.l.b16 %v128
    %v289 = vunpack.c.l.b16 %v129
    %v290 = vunpack.c.l.b16 %v130
    %v291 = vunpack.c.l.b16 %v131
    %v292 = vunpack.c.l.b16 %v132
    %v293 = vunpack.c.l.b16 %v133
    %v294 = vunpack.c.l.b16 %v134
    %v295 = vunpack.c.l.b16 %v135
    %v296 = vunpack.c.l.b16 %v136
    %v297 = vunpack.c.l.b16 %v137
    %v298 = vunpack.c.l.b16 %v138
    %v299 = vunpack.c.l.b16 %v139
    %v300 = vunpack.c.l.b16 %v140
    %v301 = vunpack.c.l.b16 %v141
    %v302 = vpack.c.b16 %v287, %v286
    %v303 = vpack.c.b16 %v289, %v288
    %v304 = vpack.c.b16 %v291, %v290
    %v305 = vpack.c.b16 %v293, %v292
    %v306 = vpack.c.b16 %v295, %v294
    %v307 = vpack.c.b16 %v297, %v296
    %v308 = vpack.c.b16 %v299, %v298
    %v309 = vpack.c.b16 %v301, %v300
    %318 = vmatprep.subr.bf16.mxu0 0
    %319 = vmatpush1.bf16.msra.mxu0 %v302
    %320 = vmatprep.subr.bf16.mxu0 0
    %321 = vmatpush1.bf16.msra.mxu0 %v303
    %322 = vmatprep.subr.bf16.mxu0 0
    %323 = vmatpush1.bf16.msra.mxu0 %v304
    %324 = vmatprep.subr.bf16.mxu0 0
    %325 = vmatpush1.bf16.msra.mxu0 %v305
    %326 = vmatprep.subr.bf16.mxu0 0
    %327 = vmatpush1.bf16.msra.mxu0 %v306
    %328 = vmatprep.subr.bf16.mxu0 0
    %329 = vmatpush1.bf16.msra.mxu0 %v307
    %330 = vmatprep.subr.bf16.mxu0 0
    %331 = vmatpush1.bf16.msra.mxu0 %v308
    %332 = vmatprep.subr.bf16.mxu0 0
    %333 = vmatpush1.bf16.msra.mxu0 %v309
    %334 = vmatprep.subr.bf16.mxu0 0
    %335 = vmatpush1.bf16.msra.mxu0 0
    %336 = vmatprep.subr.bf16.mxu0 0
    %337 = vmatpush1.bf16.msra.mxu0 0
    %338 = vmatprep.subr.bf16.mxu0 0
    %339 = vmatpush1.bf16.msra.mxu0 0
    %340 = vmatprep.subr.bf16.mxu0 0
    %341 = vmatpush1.bf16.msra.mxu0 0
    %342 = vmatprep.subr.bf16.mxu0 0
    %343 = vmatpush1.bf16.msra.mxu0 0
    %344 = vmatprep.subr.bf16.mxu0 0
    %345 = vmatpush1.bf16.msra.mxu0 0
    %346 = vmatprep.subr.bf16.mxu0 0
    %347 = vmatpush1.bf16.msra.mxu0 0
    %348 = vmatprep.subr.bf16.mxu0 0
    %349 = vmatpush1.bf16.msra.mxu0 0
    %350 = vmatprep.mubr.bf16.mxu0 0
    %351 = vmatmul.mubr.bf16.gmra.mrb[0].mxu0 %v263
    %v352 = vpop.f32.mrb[0].mxu0
    %v353 = vadd.f32 %v268, %v352
    %v354 = vpop.f32.mrb[0].mxu0
    %v355 = vpop.f32.mrb[0].mxu0
    %v356 = vadd.f32 %v268, %v355
    %v357 = vpop.f32.mrb[0].mxu0
    %358 = vdwg.mxu0
    %v359 = vmax.f32 %v353, 0.0
    %v360 = vmax.f32 %v356, 0.0
    %v361 = vpack.c.bf16 %v360, %v359
    %v363 = vlaneseq
    %v364 = vshrl.u32 %v363, 7
    %v365 = vsub.s32 0, %v364
    %v366 = vrot.slane %v192, %v365
    %v384 = vunpack.c.l.b16 %v142
    %v385 = vunpack.c.l.b16 %v143
    %v386 = vunpack.c.l.b16 %v144
    %v387 = vunpack.c.l.b16 %v145
    %v388 = vunpack.c.l.b16 %v146
    %v389 = vunpack.c.l.b16 %v147
    %v390 = vunpack.c.l.b16 %v148
    %v391 = vunpack.c.l.b16 %v149
    %v392 = vunpack.c.l.b16 %v150
    %v393 = vunpack.c.l.b16 %v151
    %v394 = vunpack.c.l.b16 %v152
    %v395 = vunpack.c.l.b16 %v153
    %v396 = vunpack.c.l.b16 %v154
    %v397 = vunpack.c.l.b16 %v155
    %v398 = vunpack.c.l.b16 %v156
    %v399 = vunpack.c.l.b16 %v157
    %v400 = vpack.c.b16 %v385, %v384
    %v401 = vpack.c.b16 %v387, %v386
    %v402 = vpack.c.b16 %v389, %v388
    %v403 = vpack.c.b16 %v391, %v390
    %v404 = vpack.c.b16 %v393, %v392
    %v405 = vpack.c.b16 %v395, %v394
    %v406 = vpack.c.b16 %v397, %v396
    %v407 = vpack.c.b16 %v399, %v398
    %416 = vmatprep.subr.bf16.mxu0 0
    %417 = vmatpush1.bf16.msra.mxu0 %v400
    %418 = vmatprep.subr.bf16.mxu0 0
    %419 = vmatpush1.bf16.msra.mxu0 %v401
    %420 = vmatprep.subr.bf16.mxu0 0
    %421 = vmatpush1.bf16.msra.mxu0 %v402
    %422 = vmatprep.subr.bf16.mxu0 0
    %423 = vmatpush1.bf16.msra.mxu0 %v403
    %424 = vmatprep.subr.bf16.mxu0 0
    %425 = vmatpush1.bf16.msra.mxu0 %v404
    %426 = vmatprep.subr.bf16.mxu0 0
    %427 = vmatpush1.bf16.msra.mxu0 %v405
    %428 = vmatprep.subr.bf16.mxu0 0
    %429 = vmatpush1.bf16.msra.mxu0 %v406
    %430 = vmatprep.subr.bf16.mxu0 0
    %431 = vmatpush1.bf16.msra.mxu0 %v407
    %432 = vmatprep.subr.bf16.mxu0 0
    %433 = vmatpush1.bf16.msra.mxu0 0
    %434 = vmatprep.subr.bf16.mxu0 0
    %435 = vmatpush1.bf16.msra.mxu0 0
    %436 = vmatprep.subr.bf16.mxu0 0
    %437 = vmatpush1.bf16.msra.mxu0 0
    %438 = vmatprep.subr.bf16.mxu0 0
    %439 = vmatpush1.bf16.msra.mxu0 0
    %440 = vmatprep.subr.bf16.mxu0 0
    %441 = vmatpush1.bf16.msra.mxu0 0
    %442 = vmatprep.subr.bf16.mxu0 0
    %443 = vmatpush1.bf16.msra.mxu0 0
    %444 = vmatprep.subr.bf16.mxu0 0
    %445 = vmatpush1.bf16.msra.mxu0 0
    %446 = vmatprep.subr.bf16.mxu0 0
    %447 = vmatpush1.bf16.msra.mxu0 0
    %448 = vmatprep.mubr.bf16.mxu0 0
    %449 = vmatmul.mubr.bf16.gmra.mrb[0].mxu0 %v361
    %v450 = vpop.f32.mrb[0].mxu0
    %v451 = vadd.f32 %v366, %v450
    %v452 = vpop.f32.mrb[0].mxu0
    %v453 = vpop.f32.mrb[0].mxu0
    %v454 = vadd.f32 %v366, %v453
    %v455 = vpop.f32.mrb[0].mxu0
    %456 = vdwg.mxu0
    %v457 = vmax.f32 %v451, 0.0
    %v458 = vmax.f32 %v454, 0.0
    %v459 = vpack.c.bf16 %v458, %v457
    %v461 = vlaneseq
    %v462 = vshrl.u32 %v461, 7
    %v463 = vsub.s32 0, %v462
    %v464 = vrot.slane %v193, %v463
    %v482 = vunpack.c.l.b16 %v158
    %v483 = vunpack.c.l.b16 %v159
    %v484 = vunpack.c.l.b16 %v160
    %v485 = vunpack.c.l.b16 %v161
    %v486 = vunpack.c.l.b16 %v162
    %v487 = vunpack.c.l.b16 %v163
    %v488 = vunpack.c.l.b16 %v164
    %v489 = vunpack.c.l.b16 %v165
    %v490 = vunpack.c.l.b16 %v166
    %v491 = vunpack.c.l.b16 %v167
    %v492 = vunpack.c.l.b16 %v168
    %v493 = vunpack.c.l.b16 %v169
    %v494 = vunpack.c.l.b16 %v170
    %v495 = vunpack.c.l.b16 %v171
    %v496 = vunpack.c.l.b16 %v172
    %v497 = vunpack.c.l.b16 %v173
    %v498 = vpack.c.b16 %v483, %v482
    %v499 = vpack.c.b16 %v485, %v484
    %v500 = vpack.c.b16 %v487, %v486
    %v501 = vpack.c.b16 %v489, %v488
    %v502 = vpack.c.b16 %v491, %v490
    %v503 = vpack.c.b16 %v493, %v492
    %v504 = vpack.c.b16 %v495, %v494
    %v505 = vpack.c.b16 %v497, %v496
    %514 = vmatprep.subr.bf16.mxu0 0
    %515 = vmatpush1.bf16.msra.mxu0 %v498
    %516 = vmatprep.subr.bf16.mxu0 0
    %517 = vmatpush1.bf16.msra.mxu0 %v499
    %518 = vmatprep.subr.bf16.mxu0 0
    %519 = vmatpush1.bf16.msra.mxu0 %v500
    %520 = vmatprep.subr.bf16.mxu0 0
    %521 = vmatpush1.bf16.msra.mxu0 %v501
    %522 = vmatprep.subr.bf16.mxu0 0
    %523 = vmatpush1.bf16.msra.mxu0 %v502
    %524 = vmatprep.subr.bf16.mxu0 0
    %525 = vmatpush1.bf16.msra.mxu0 %v503
    %526 = vmatprep.subr.bf16.mxu0 0
    %527 = vmatpush1.bf16.msra.mxu0 %v504
    %528 = vmatprep.subr.bf16.mxu0 0
    %529 = vmatpush1.bf16.msra.mxu0 %v505
    %530 = vmatprep.subr.bf16.mxu0 0
    %531 = vmatpush1.bf16.msra.mxu0 0
    %532 = vmatprep.subr.bf16.mxu0 0
    %533 = vmatpush1.bf16.msra.mxu0 0
    %534 = vmatprep.subr.bf16.mxu0 0
    %535 = vmatpush1.bf16.msra.mxu0 0
    %536 = vmatprep.subr.bf16.mxu0 0
    %537 = vmatpush1.bf16.msra.mxu0 0
    %538 = vmatprep.subr.bf16.mxu0 0
    %539 = vmatpush1.bf16.msra.mxu0 0
    %540 = vmatprep.subr.bf16.mxu0 0
    %541 = vmatpush1.bf16.msra.mxu0 0
    %542 = vmatprep.subr.bf16.mxu0 0
    %543 = vmatpush1.bf16.msra.mxu0 0
    %544 = vmatprep.subr.bf16.mxu0 0
    %545 = vmatpush1.bf16.msra.mxu0 0
    %546 = vmatprep.mubr.bf16.mxu0 0
    %547 = vmatmul.mubr.bf16.gmra.mrb[0].mxu0 %v459
    %v548 = vpop.f32.mrb[0].mxu0
    %v549 = vadd.f32 %v464, %v548
    %v550 = vpop.f32.mrb[0].mxu0
    %v551 = vpop.f32.mrb[0].mxu0
    %v552 = vadd.f32 %v464, %v551
    %v553 = vpop.f32.mrb[0].mxu0
    %554 = vdwg.mxu0
    %v555 = vmax.f32 %v549, 0.0
    %v556 = vmax.f32 %v552, 0.0
    %v557 = vpack.c.bf16 %v556, %v555
    %v559 = vlaneseq
    %v560 = vshrl.u32 %v559, 7
    %v561 = vsub.s32 0, %v560
    %v562 = vrot.slane %v194, %v561
    %v580 = vunpack.c.l.b16 %v174
    %v581 = vunpack.c.l.b16 %v175
    %v582 = vunpack.c.l.b16 %v176
    %v583 = vunpack.c.l.b16 %v177
    %v584 = vunpack.c.l.b16 %v178
    %v585 = vunpack.c.l.b16 %v179
    %v586 = vunpack.c.l.b16 %v180
    %v587 = vunpack.c.l.b16 %v181
    %v588 = vunpack.c.l.b16 %v182
    %v589 = vunpack.c.l.b16 %v183
    %v590 = vunpack.c.l.b16 %v184
    %v591 = vunpack.c.l.b16 %v185
    %v592 = vunpack.c.l.b16 %v186
    %v593 = vunpack.c.l.b16 %v187
    %v594 = vunpack.c.l.b16 %v188
    %v595 = vunpack.c.l.b16 %v189
    %v596 = vpack.c.b16 %v581, %v580
    %v597 = vpack.c.b16 %v583, %v582
    %v598 = vpack.c.b16 %v585, %v584
    %v599 = vpack.c.b16 %v587, %v586
    %v600 = vpack.c.b16 %v589, %v588
    %v601 = vpack.c.b16 %v591, %v590
    %v602 = vpack.c.b16 %v593, %v592
    %v603 = vpack.c.b16 %v595, %v594
    %612 = vmatprep.subr.bf16.mxu0 0
    %613 = vmatpush1.bf16.msra.mxu0 %v596
    %614 = vmatprep.subr.bf16.mxu0 0
    %615 = vmatpush1.bf16.msra.mxu0 %v597
    %616 = vmatprep.subr.bf16.mxu0 0
    %617 = vmatpush1.bf16.msra.mxu0 %v598
    %618 = vmatprep.subr.bf16.mxu0 0
    %619 = vmatpush1.bf16.msra.mxu0 %v599
    %620 = vmatprep.subr.bf16.mxu0 0
    %621 = vmatpush1.bf16.msra.mxu0 %v600
    %622 = vmatprep.subr.bf16.mxu0 0
    %623 = vmatpush1.bf16.msra.mxu0 %v601
    %624 = vmatprep.subr.bf16.mxu0 0
    %625 = vmatpush1.bf16.msra.mxu0 %v602
    %626 = vmatprep.subr.bf16.mxu0 0
    %627 = vmatpush1.bf16.msra.mxu0 %v603
    %628 = vmatprep.subr.bf16.mxu0 0
    %629 = vmatpush1.bf16.msra.mxu0 0
    %630 = vmatprep.subr.bf16.mxu0 0
    %631 = vmatpush1.bf16.msra.mxu0 0
    %632 = vmatprep.subr.bf16.mxu0 0
    %633 = vmatpush1.bf16.msra.mxu0 0
    %634 = vmatprep.subr.bf16.mxu0 0
    %635 = vmatpush1.bf16.msra.mxu0 0
    %636 = vmatprep.subr.bf16.mxu0 0
    %637 = vmatpush1.bf16.msra.mxu0 0
    %638 = vmatprep.subr.bf16.mxu0 0
    %639 = vmatpush1.bf16.msra.mxu0 0
    %640 = vmatprep.subr.bf16.mxu0 0
    %641 = vmatpush1.bf16.msra.mxu0 0
    %642 = vmatprep.subr.bf16.mxu0 0
    %643 = vmatpush1.bf16.msra.mxu0 0
    %644 = vmatprep.mubr.bf16.mxu0 0
    %645 = vmatmul.mubr.bf16.gmra.mrb[0].mxu0 %v557
    %v646 = vpop.f32.mrb[0].mxu0
    %v647 = vadd.f32 %v562, %v646
    %v648 = vpop.f32.mrb[0].mxu0
    %v649 = vpop.f32.mrb[0].mxu0
    %v650 = vadd.f32 %v562, %v649
    %v651 = vpop.f32.mrb[0].mxu0
    %652 = vdwg.mxu0
    %653 = vst [vmem:[#allocation13] sm:$0xff] %v647
    %654 = vst [vmem:[#allocation13 + $0x8] sm:$0xff] %v650
    // Predicated region
    $region70: #{tpu_custom_call.1} parent=1 // pred_check
      _
    $region71: #{tpu_custom_call.1} parent=1 // pred_check_branch
      %656 = sbr.rel (0) target = $region73
    $region72: #{tpu_custom_call.1} parent=1 // pred_region
      %s658 = ssub.s32 256, 256
      %659 = vsyncadd [#allocation4], %s658
      %s660 = sshll.u32 [#allocation13], 4
      %s661 = int_to_ptr.vmem [resolvable:$true] %s660
      %666 = dma.vmem_to_hbm [thread:$0]  %s661, 256, %s11, [#allocation4], 128, 128, 8
    $region73: #{tpu_custom_call.1} parent=1 // pred_fallthru
      _
    // Predicated region
    $region74: #{tpu_custom_call.1} parent=1 // pred_check
      _
    $region75: #{tpu_custom_call.1} parent=1 // pred_check_branch
      %668 = sbr.rel (0) target = $region77
    $region76: #{tpu_custom_call.1} parent=1 // pred_region
      %669 = dma.done [#allocation4], 256
    $region77: #{tpu_custom_call.1} parent=1 // pred_fallthru
      _
    %670 = vsyncpa [#allocation3], 1
    %671 = vsyncpa [#allocation6], 1
    %672 = vsyncpa [#allocation9], 1
    %673 = vsyncpa [#allocation12], 1
    %674 = vsyncpa [#allocation4], 1

</llo_original>
